<compile_context>
chip_gen: v5e
topology: v5e:2x2
jax: 0.10.0
libtpu: 0.0.40
codegen_flags: <defaults>
</compile_context>

<pallas_src>
import jax
import jax.numpy as jnp
from jax.experimental import pallas as pl
from jax.experimental.pallas import tpu as pltpu

IN_F, HID, OUT_F = 1, 50, 1
HID_PAD = 128          # lane/sublane aligned hidden width (internal only)
MAX_TILE_N = 1024      # batch tile (lanes per grid step), multiple of 128


def mlp_kernel(x_ref, w1_ref, b1_ref, w2_ref, b2_ref, w3_ref, b3_ref, o_ref):
    # Layout (batch along lanes):
    #   x_ref : (1, tile_n)
    #   w1_ref: (HID_PAD, 1)        b1_ref: (HID_PAD, 1)
    #   w2_ref: (HID_PAD, HID_PAD)  b2_ref: (HID_PAD, 1)   (PyTorch (out, in))
    #   w3_ref: (1, HID_PAD)        b3_ref: (1, 1)
    #   o_ref : (1, tile_n)
    x = x_ref[...]                                            # (1, tile_n)

    # Layer 1: in_features == 1  ->  pure outer product on the VPU.
    h1 = jnp.maximum(w1_ref[...] * x + b1_ref[...], 0.0)      # (HID_PAD, tile_n)

    # Layer 2: 128x128 contraction on the MXU.
    h2 = jnp.maximum(
        jnp.dot(w2_ref[...], h1, preferred_element_type=jnp.float32) + b2_ref[...],
        0.0,
    )                                                          # (HID_PAD, tile_n)

    # Layer 3: (1,128) @ (128, tile_n) on the MXU -> lane-dense (1, tile_n) out.
    o_ref[...] = (
        jnp.dot(w3_ref[...], h2, preferred_element_type=jnp.float32) + b3_ref[...]
    ).astype(o_ref.dtype)


def _pad2d(a, rows, cols):
    return jnp.pad(a, ((0, rows - a.shape[0]), (0, cols - a.shape[1])))


def prepare_params(params):
    """One-time prep: pad PyTorch (out, in) weights; no transposes needed."""
    (w1, b1), (w2, b2), (w3, b3) = params
    w1_p = _pad2d(jnp.asarray(w1, jnp.float32), HID_PAD, 1)            # (128, 1)
    b1_p = _pad2d(jnp.asarray(b1, jnp.float32).reshape(-1, 1), HID_PAD, 1)
    w2_p = _pad2d(jnp.asarray(w2, jnp.float32), HID_PAD, HID_PAD)      # (128, 128)
    b2_p = _pad2d(jnp.asarray(b2, jnp.float32).reshape(-1, 1), HID_PAD, 1)
    w3_p = _pad2d(jnp.asarray(w3, jnp.float32), 1, HID_PAD)            # (1, 128)
    b3_p = jnp.asarray(b3, jnp.float32).reshape(1, 1)                  # (1, 1)
    return (w1_p, b1_p, w2_p, b2_p, w3_p, b3_p)


def mlp_forward(x, prepared_params):
    """x: (N, 1) float32 -> (N, 1) float32."""
    w1_p, b1_p, w2_p, b2_p, w3_p, b3_p = prepared_params
    n = x.shape[0]

    n128 = ((n + 127) // 128) * 128
    tile_n = min(MAX_TILE_N, n128)                 # multiple of 128 by construction
    n_pad = pl.cdiv(n128, tile_n) * tile_n         # multiple of tile_n
    grid = (n_pad // tile_n,)

    # Batch along the lane axis: (1, N_pad), lane-dense loads/stores.
    x_lanes = jnp.pad(x.astype(jnp.float32).reshape(1, n), ((0, 0), (0, n_pad - n)))

    col_map = lambda i: (0, i)       # batch-tiled (along lanes) arrays
    const_map = lambda i: (0, 0)     # VMEM-resident weights / biases

    out_padded = pl.pallas_call(
        mlp_kernel,
        out_shape=jax.ShapeDtypeStruct((1, n_pad), jnp.float32),
        grid=grid,
        in_specs=[
            pl.BlockSpec((1, tile_n), col_map),            # x
            pl.BlockSpec((HID_PAD, 1), const_map),         # w1
            pl.BlockSpec((HID_PAD, 1), const_map),         # b1
            pl.BlockSpec((HID_PAD, HID_PAD), const_map),   # w2
            pl.BlockSpec((HID_PAD, 1), const_map),         # b2
            pl.BlockSpec((1, HID_PAD), const_map),         # w3
            pl.BlockSpec((1, 1), const_map),               # b3
        ],
        out_specs=pl.BlockSpec((1, tile_n), col_map),
        compiler_params=pltpu.CompilerParams(
            dimension_semantics=("parallel",),
        ),
    )(x_lanes, w1_p, b1_p, w2_p, b2_p, w3_p, b3_p)

    return out_padded[0, :n].reshape(n, OUT_F)


def init_params(key):
    """Deterministic init matching torch.nn.Linear's U(-1/sqrt(fan_in), ..)."""
    def linear_init(k, fan_in, fan_out):
        kw, kb = jax.random.split(k)
        bound = 1.0 / jnp.sqrt(float(fan_in))
        w = jax.random.uniform(kw, (fan_out, fan_in), jnp.float32, -bound, bound)
        b = jax.random.uniform(kb, (fan_out,), jnp.float32, -bound, bound)
        return w, b

    k1, k2, k3 = jax.random.split(key, 3)
    return (
        linear_init(k1, IN_F, HID),
        linear_init(k2, HID, HID),
        linear_init(k3, HID, OUT_F),
    )


def reference_forward(x, params):
    (w1, b1), (w2, b2), (w3, b3) = params
    h1 = jnp.maximum(x @ w1.T + b1, 0.0)
    h2 = jnp.maximum(h1 @ w2.T + b2, 0.0)
    return h2 @ w3.T + b3


if __name__ == "__main__":
    key = jax.random.PRNGKey(0)
    params = init_params(key)
    prepared = prepare_params(params)

    # Same input as the original script: x = np.linspace(0, 1, 100).reshape(-1, 1)
    x = jnp.linspace(0.0, 1.0, 100, dtype=jnp.float32).reshape(-1, 1)

    out = mlp_forward(x, prepared)
    out = jax.block_until_ready(out)
    ref = reference_forward(x, params)
    assert out.shape == (100, 1), out.shape
    assert jnp.allclose(out, ref, atol=1e-5, rtol=1e-5), "mismatch vs JAX reference"

    # Larger batch exercises the multi-tile grid path (grid > 1).
    x_big = jax.random.uniform(jax.random.PRNGKey(1), (1000, 1), jnp.float32)
    out_big = jax.block_until_ready(mlp_forward(x_big, prepared))
    ref_big = reference_forward(x_big, params)
    assert out_big.shape == (1000, 1), out_big.shape
    assert jnp.allclose(out_big, ref_big, atol=1e-5, rtol=1e-5), "mismatch (batched)"

    print("KERNEL_OK")
</pallas_src>

<mosaic_0001>
module attributes {stable_mosaic.version = 11 : i64} {
  func.func @mlp_kernel(%arg0: i32, %arg1: memref<1x128xf32, #tpu.memory_space<vmem>>, %arg2: memref<128x1xf32, #tpu.memory_space<vmem>>, %arg3: memref<128x1xf32, #tpu.memory_space<vmem>>, %arg4: memref<128x128xf32, #tpu.memory_space<vmem>>, %arg5: memref<128x1xf32, #tpu.memory_space<vmem>>, %arg6: memref<1x128xf32, #tpu.memory_space<vmem>>, %arg7: memref<1x1xf32, #tpu.memory_space<vmem>>, %arg8: memref<1x128xf32, #tpu.memory_space<vmem>>) attributes {dimension_semantics = [#tpu.dimension_semantics<parallel>], iteration_bounds = array<i64: 1>, scalar_prefetch = 0 : i64, scratch_operands = 0 : i64, tpu.core_type = #tpu.core_type<tc>, window_params = [{transform_indices = @transform_0, window_bounds = array<i64: 1, 128>}, {pipeline_mode = #tpu.pipeline_mode<synchronous>, transform_indices = @transform_1, window_bounds = array<i64: 128, 1>}, {pipeline_mode = #tpu.pipeline_mode<synchronous>, transform_indices = @transform_2, window_bounds = array<i64: 128, 1>}, {pipeline_mode = #tpu.pipeline_mode<synchronous>, transform_indices = @transform_3, window_bounds = array<i64: 128, 128>}, {pipeline_mode = #tpu.pipeline_mode<synchronous>, transform_indices = @transform_4, window_bounds = array<i64: 128, 1>}, {pipeline_mode = #tpu.pipeline_mode<synchronous>, transform_indices = @transform_5, window_bounds = array<i64: 1, 128>}, {pipeline_mode = #tpu.pipeline_mode<synchronous>, transform_indices = @transform_6, window_bounds = array<i64: 1, 1>}, {transform_indices = @transform_7, window_bounds = array<i64: 1, 128>}]} {
    %c0 = arith.constant 0 : index
    %c0_0 = arith.constant 0 : index
    %0 = vector.load %arg1[%c0, %c0_0] : memref<1x128xf32, #tpu.memory_space<vmem>>, vector<1x128xf32>
    %c0_1 = arith.constant 0 : index
    %c0_2 = arith.constant 0 : index
    %1 = vector.load %arg2[%c0_1, %c0_2] : memref<128x1xf32, #tpu.memory_space<vmem>>, vector<128x1xf32>
    %2 = vector.broadcast %1 : vector<128x1xf32> to vector<128x128xf32>
    %3 = vector.broadcast %0 : vector<1x128xf32> to vector<128x128xf32>
    %4 = arith.mulf %2, %3 : vector<128x128xf32>
    %c0_3 = arith.constant 0 : index
    %c0_4 = arith.constant 0 : index
    %5 = vector.load %arg3[%c0_3, %c0_4] : memref<128x1xf32, #tpu.memory_space<vmem>>, vector<128x1xf32>
    %6 = vector.broadcast %5 : vector<128x1xf32> to vector<128x128xf32>
    %7 = arith.addf %4, %6 : vector<128x128xf32>
    %cst = arith.constant 0.000000e+00 : f32
    %8 = vector.broadcast %cst : f32 to vector<128x128xf32>
    %9 = arith.maximumf %7, %8 : vector<128x128xf32>
    %c0_5 = arith.constant 0 : index
    %c0_6 = arith.constant 0 : index
    %10 = vector.load %arg4[%c0_5, %c0_6] : memref<128x128xf32, #tpu.memory_space<vmem>>, vector<128x128xf32>
    %cst_7 = arith.constant dense<0.000000e+00> : vector<128x128xf32>
    %11 = tpu.matmul %10, %9, %cst_7 {dimension_numbers = #tpu.dot_dimension_numbers<[1], [0], [0], [1], [0, 0, 1, 1], [], []>} : vector<128x128xf32>, vector<128x128xf32>, vector<128x128xf32> -> vector<128x128xf32>
    %c0_8 = arith.constant 0 : index
    %c0_9 = arith.constant 0 : index
    %12 = vector.load %arg5[%c0_8, %c0_9] : memref<128x1xf32, #tpu.memory_space<vmem>>, vector<128x1xf32>
    %13 = vector.broadcast %12 : vector<128x1xf32> to vector<128x128xf32>
    %14 = arith.addf %11, %13 : vector<128x128xf32>
    %cst_10 = arith.constant 0.000000e+00 : f32
    %15 = vector.broadcast %cst_10 : f32 to vector<128x128xf32>
    %16 = arith.maximumf %14, %15 : vector<128x128xf32>
    %c0_11 = arith.constant 0 : index
    %c0_12 = arith.constant 0 : index
    %17 = vector.load %arg6[%c0_11, %c0_12] : memref<1x128xf32, #tpu.memory_space<vmem>>, vector<1x128xf32>
    %cst_13 = arith.constant dense<0.000000e+00> : vector<1x128xf32>
    %18 = tpu.matmul %17, %16, %cst_13 {dimension_numbers = #tpu.dot_dimension_numbers<[1], [0], [0], [1], [0, 0, 1, 1], [], []>} : vector<1x128xf32>, vector<128x128xf32>, vector<1x128xf32> -> vector<1x128xf32>
    %c0_14 = arith.constant 0 : index
    %c0_15 = arith.constant 0 : index
    %19 = vector.load %arg7[%c0_14, %c0_15] : memref<1x1xf32, #tpu.memory_space<vmem>>, vector<1x1xf32>
    %20 = vector.broadcast %19 : vector<1x1xf32> to vector<1x128xf32>
    %21 = arith.addf %18, %20 : vector<1x128xf32>
    %c0_16 = arith.constant 0 : index
    %c0_17 = arith.constant 0 : index
    %22 = vector.load %arg8[%c0_16, %c0_17] : memref<1x128xf32, #tpu.memory_space<vmem>>, vector<1x128xf32>
    tpu.vector_store %arg8[%c0_16, %c0_17], %21 {strides = array<i32>} : memref<1x128xf32, #tpu.memory_space<vmem>>, vector<1x128xf32>,
    return
  }
  func.func @transform_0(%arg0: i32) -> (i32, i32) {
    %c0_i32 = arith.constant 0 : i32
    %c0_i32_0 = arith.constant 0 : i32
    return %c0_i32, %arg0 : i32, i32
  }
  func.func @transform_1(%arg0: i32) -> (i32, i32) {
    %c0_i32 = arith.constant 0 : i32
    %c0_i32_0 = arith.constant 0 : i32
    %c0_i32_1 = arith.constant 0 : i32
    return %c0_i32, %c0_i32_0 : i32, i32
  }
  func.func @transform_2(%arg0: i32) -> (i32, i32) {
    %c0_i32 = arith.constant 0 : i32
    %c0_i32_0 = arith.constant 0 : i32
    %c0_i32_1 = arith.constant 0 : i32
    return %c0_i32, %c0_i32_0 : i32, i32
  }
  func.func @transform_3(%arg0: i32) -> (i32, i32) {
    %c0_i32 = arith.constant 0 : i32
    %c0_i32_0 = arith.constant 0 : i32
    %c0_i32_1 = arith.constant 0 : i32
    return %c0_i32, %c0_i32_0 : i32, i32
  }
  func.func @transform_4(%arg0: i32) -> (i32, i32) {
    %c0_i32 = arith.constant 0 : i32
    %c0_i32_0 = arith.constant 0 : i32
    %c0_i32_1 = arith.constant 0 : i32
    return %c0_i32, %c0_i32_0 : i32, i32
  }
  func.func @transform_5(%arg0: i32) -> (i32, i32) {
    %c0_i32 = arith.constant 0 : i32
    %c0_i32_0 = arith.constant 0 : i32
    %c0_i32_1 = arith.constant 0 : i32
    return %c0_i32, %c0_i32_0 : i32, i32
  }
  func.func @transform_6(%arg0: i32) -> (i32, i32) {
    %c0_i32 = arith.constant 0 : i32
    %c0_i32_0 = arith.constant 0 : i32
    %c0_i32_1 = arith.constant 0 : i32
    return %c0_i32, %c0_i32_0 : i32, i32
  }
  func.func @transform_7(%arg0: i32) -> (i32, i32) {
    %c0_i32 = arith.constant 0 : i32
    %c0_i32_0 = arith.constant 0 : i32
    return %c0_i32, %arg0 : i32, i32
  }
}

</mosaic_0001>

<llo_original>
// kernel: tpu_custom_call.1
$region0: #{tpu_custom_call.1}
  #allocation0 [shape = 'u32[]', space=smem, size = 0x4, offset = 0x4, fixed_abs, tag = 'smem constant byte address 0x4 - core index']
  #allocation1 [shape = 'u32[72,128]{1,0:T(1,128)}', space=vmem, size = 0x9000, scoped, tag = 'internal scratch']
  #allocation2 [shape = 'f32[1,1]{1,0:T(1,128)S(1)}', space=vmem, size = 0x200, scoped, tag = 'scoped memory for tpu_custom_call.1']
  %s0 = inlined_call_operand.vmem [shape: f32[1,128], index: 0, kind: input, shape index: {}]
  %s1 = inlined_call_operand.vmem [shape: f32[128,1], index: 1, kind: input, shape index: {}]
  %s2 = inlined_call_operand.vmem [shape: f32[128,1], index: 2, kind: input, shape index: {}]
  %s3 = inlined_call_operand.vmem [shape: f32[128,128], index: 3, kind: input, shape index: {}]
  %s4 = inlined_call_operand.vmem [shape: f32[128,1], index: 4, kind: input, shape index: {}]
  %s5 = inlined_call_operand.vmem [shape: f32[1,128], index: 5, kind: input, shape index: {}]
  %s6 = inlined_call_operand.<no memory space> [shape: f32[1,1], index: 6, kind: input, shape index: {}]
  %s7 = inlined_call_operand.hbm [shape: f32[1,128], index: 7, kind: output, shape index: {}]
  %s8 = sld [smem:[#allocation0]]
  $region38: #{tpu_custom_call.1} parent=0
    _
  %s10 = ssub.s32 1, %s8
  %s11 = scalar_select 0, %s10, %s8
  %v12 = vstv %s6
  %13 = vst [vmem:[#allocation2] sm:$0x1] %v12
  $region1: #{tpu_custom_call.1} parent=0
    #allocation3 [shape = 'u8[512]{0}', space=vmem, size = 0x400, scoped, tag = 'output window, operand 0, single buffered']
    #allocation4 [shape = 's32[1]{0}', space=sflag, size = 0x4, scoped, tag = 'scoped memory for tpu_custom_call.1']
    %14 = vsyncpa [#allocation4], 0
    // Predicated region
    $region2: #{tpu_custom_call.1} parent=1 // pred_check
      _
    $region3: #{tpu_custom_call.1} parent=1 // pred_check_branch
      %16 = sbr.rel (0) target = $region5
    $region4: #{tpu_custom_call.1} parent=1 // pred_region
      _
    $region5: #{tpu_custom_call.1} parent=1 // pred_fallthru
      _
    // Predicated region
    $region6: #{tpu_custom_call.1} parent=1 // pred_check
      _
    $region7: #{tpu_custom_call.1} parent=1 // pred_check_branch
      %18 = sbr.rel (0) target = $region9
    $region8: #{tpu_custom_call.1} parent=1 // pred_region
      _
    $region9: #{tpu_custom_call.1} parent=1 // pred_fallthru
      _
    // Predicated region
    $region10: #{tpu_custom_call.1} parent=1 // pred_check
      _
    $region11: #{tpu_custom_call.1} parent=1 // pred_check_branch
      %20 = sbr.rel (0) target = $region13
    $region12: #{tpu_custom_call.1} parent=1 // pred_region
      _
    $region13: #{tpu_custom_call.1} parent=1 // pred_fallthru
      _
    // Predicated region
    $region14: #{tpu_custom_call.1} parent=1 // pred_check
      _
    $region15: #{tpu_custom_call.1} parent=1 // pred_check_branch
      %22 = sbr.rel (0) target = $region17
    $region16: #{tpu_custom_call.1} parent=1 // pred_region
      _
    $region17: #{tpu_custom_call.1} parent=1 // pred_fallthru
      _
    // Predicated region
    $region18: #{tpu_custom_call.1} parent=1 // pred_check
      _
    $region19: #{tpu_custom_call.1} parent=1 // pred_check_branch
      %24 = sbr.rel (0) target = $region21
    $region20: #{tpu_custom_call.1} parent=1 // pred_region
      _
    $region21: #{tpu_custom_call.1} parent=1 // pred_fallthru
      _
    // Predicated region
    $region22: #{tpu_custom_call.1} parent=1 // pred_check
      _
    $region23: #{tpu_custom_call.1} parent=1 // pred_check_branch
      %26 = sbr.rel (0) target = $region25
    $region24: #{tpu_custom_call.1} parent=1 // pred_region
      _
    $region25: #{tpu_custom_call.1} parent=1 // pred_fallthru
      _
    // Predicated region
    $region26: #{tpu_custom_call.1} parent=1 // pred_check
      _
    $region27: #{tpu_custom_call.1} parent=1 // pred_check_branch
      %28 = sbr.rel (0) target = $region29
    $region28: #{tpu_custom_call.1} parent=1 // pred_region
      _
    $region29: #{tpu_custom_call.1} parent=1 // pred_fallthru
      _
    %v29 = vld [vmem:[%s0] sm:$0x1]
    %v30 = vld [vmem:[%s1] sm:$0xff]
    %v31 = vld [vmem:[%s1 + $0x8] sm:$0xff]
    %v32 = vld [vmem:[%s1 + $0x10] sm:$0xff]
    %v33 = vld [vmem:[%s1 + $0x18] sm:$0xff]
    %v34 = vld [vmem:[%s1 + $0x20] sm:$0xff]
    %v35 = vld [vmem:[%s1 + $0x28] sm:$0xff]
    %v36 = vld [vmem:[%s1 + $0x30] sm:$0xff]
    %v37 = vld [vmem:[%s1 + $0x38] sm:$0xff]
    %v38 = vld [vmem:[%s1 + $0x40] sm:$0xff]
    %v39 = vld [vmem:[%s1 + $0x48] sm:$0xff]
    %v40 = vld [vmem:[%s1 + $0x50] sm:$0xff]
    %v41 = vld [vmem:[%s1 + $0x58] sm:$0xff]
    %v42 = vld [vmem:[%s1 + $0x60] sm:$0xff]
    %v43 = vld [vmem:[%s1 + $0x68] sm:$0xff]
    %v44 = vld [vmem:[%s1 + $0x70] sm:$0xff]
    %v45 = vld [vmem:[%s1 + $0x78] sm:$0xff]
    %47 = vset.pattern.permute.xlu0 0
    %48 = vperm.xlu0 %47, %v30
    %v49 = vpop.permute.xlu0 %48
    %52 = vset.pattern.permute.xlu0 0
    %53 = vperm.xlu0 %52, %v31
    %v54 = vpop.permute.xlu0 %53
    %57 = vset.pattern.permute.xlu0 0
    %58 = vperm.xlu0 %57, %v32
    %v59 = vpop.permute.xlu0 %58
    %62 = vset.pattern.permute.xlu0 0
    %63 = vperm.xlu0 %62, %v33
    %v64 = vpop.permute.xlu0 %63
    %67 = vset.pattern.permute.xlu0 0
    %68 = vperm.xlu0 %67, %v34
    %v69 = vpop.permute.xlu0 %68
    %72 = vset.pattern.permute.xlu0 0
    %73 = vperm.xlu0 %72, %v35
    %v74 = vpop.permute.xlu0 %73
    %77 = vset.pattern.permute.xlu0 0
    %78 = vperm.xlu0 %77, %v36
    %v79 = vpop.permute.xlu0 %78
    %82 = vset.pattern.permute.xlu0 0
    %83 = vperm.xlu0 %82, %v37
    %v84 = vpop.permute.xlu0 %83
    %87 = vset.pattern.permute.xlu0 0
    %88 = vperm.xlu0 %87, %v38
    %v89 = vpop.permute.xlu0 %88
    %92 = vset.pattern.permute.xlu0 0
    %93 = vperm.xlu0 %92, %v39
    %v94 = vpop.permute.xlu0 %93
    %97 = vset.pattern.permute.xlu0 0
    %98 = vperm.xlu0 %97, %v40
    %v99 = vpop.permute.xlu0 %98
    %102 = vset.pattern.permute.xlu0 0
    %103 = vperm.xlu0 %102, %v41
    %v104 = vpop.permute.xlu0 %103
    %107 = vset.pattern.permute.xlu0 0
    %108 = vperm.xlu0 %107, %v42
    %v109 = vpop.permute.xlu0 %108
    %112 = vset.pattern.permute.xlu0 0
    %113 = vperm.xlu0 %112, %v43
    %v114 = vpop.permute.xlu0 %113
    %117 = vset.pattern.permute.xlu0 0
    %118 = vperm.xlu0 %117, %v44
    %v119 = vpop.permute.xlu0 %118
    %122 = vset.pattern.permute.xlu0 0
    %123 = vperm.xlu0 %122, %v45
    %v124 = vpop.permute.xlu0 %123
    %v127 = vperm.slane %v29, 0
    %v129 = vmul.f32 %v49, %v127
    %v130 = vmul.f32 %v54, %v127
    %v131 = vmul.f32 %v59, %v127
    %v132 = vmul.f32 %v64, %v127
    %v133 = vmul.f32 %v69, %v127
    %v134 = vmul.f32 %v74, %v127
    %v135 = vmul.f32 %v79, %v127
    %v136 = vmul.f32 %v84, %v127
    %v137 = vmul.f32 %v89, %v127
    %v138 = vmul.f32 %v94, %v127
    %v139 = vmul.f32 %v99, %v127
    %v140 = vmul.f32 %v104, %v127
    %v141 = vmul.f32 %v109, %v127
    %v142 = vmul.f32 %v114, %v127
    %v143 = vmul.f32 %v119, %v127
    %v144 = vmul.f32 %v124, %v127
    %v145 = vld [vmem:[%s2] sm:$0xff]
    %v146 = vld [vmem:[%s2 + $0x8] sm:$0xff]
    %v147 = vld [vmem:[%s2 + $0x10] sm:$0xff]
    %v148 = vld [vmem:[%s2 + $0x18] sm:$0xff]
    %v149 = vld [vmem:[%s2 + $0x20] sm:$0xff]
    %v150 = vld [vmem:[%s2 + $0x28] sm:$0xff]
    %v151 = vld [vmem:[%s2 + $0x30] sm:$0xff]
    %v152 = vld [vmem:[%s2 + $0x38] sm:$0xff]
    %v153 = vld [vmem:[%s2 + $0x40] sm:$0xff]
    %v154 = vld [vmem:[%s2 + $0x48] sm:$0xff]
    %v155 = vld [vmem:[%s2 + $0x50] sm:$0xff]
    %v156 = vld [vmem:[%s2 + $0x58] sm:$0xff]
    %v157 = vld [vmem:[%s2 + $0x60] sm:$0xff]
    %v158 = vld [vmem:[%s2 + $0x68] sm:$0xff]
    %v159 = vld [vmem:[%s2 + $0x70] sm:$0xff]
    %v160 = vld [vmem:[%s2 + $0x78] sm:$0xff]
    %162 = vset.pattern.permute.xlu0 0
    %163 = vperm.xlu0 %162, %v145
    %v164 = vpop.permute.xlu0 %163
    %167 = vset.pattern.permute.xlu0 0
    %168 = vperm.xlu0 %167, %v146
    %v169 = vpop.permute.xlu0 %168
    %172 = vset.pattern.permute.xlu0 0
    %173 = vperm.xlu0 %172, %v147
    %v174 = vpop.permute.xlu0 %173
    %177 = vset.pattern.permute.xlu0 0
    %178 = vperm.xlu0 %177, %v148
    %v179 = vpop.permute.xlu0 %178
    %182 = vset.pattern.permute.xlu0 0
    %183 = vperm.xlu0 %182, %v149
    %v184 = vpop.permute.xlu0 %183
    %187 = vset.pattern.permute.xlu0 0
    %188 = vperm.xlu0 %187, %v150
    %v189 = vpop.permute.xlu0 %188
    %192 = vset.pattern.permute.xlu0 0
    %193 = vperm.xlu0 %192, %v151
    %v194 = vpop.permute.xlu0 %193
    %197 = vset.pattern.permute.xlu0 0
    %198 = vperm.xlu0 %197, %v152
    %v199 = vpop.permute.xlu0 %198
    %202 = vset.pattern.permute.xlu0 0
    %203 = vperm.xlu0 %202, %v153
    %v204 = vpop.permute.xlu0 %203
    %207 = vset.pattern.permute.xlu0 0
    %208 = vperm.xlu0 %207, %v154
    %v209 = vpop.permute.xlu0 %208
    %212 = vset.pattern.permute.xlu0 0
    %213 = vperm.xlu0 %212, %v155
    %v214 = vpop.permute.xlu0 %213
    %217 = vset.pattern.permute.xlu0 0
    %218 = vperm.xlu0 %217, %v156
    %v219 = vpop.permute.xlu0 %218
    %222 = vset.pattern.permute.xlu0 0
    %223 = vperm.xlu0 %222, %v157
    %v224 = vpop.permute.xlu0 %223
    %227 = vset.pattern.permute.xlu0 0
    %228 = vperm.xlu0 %227, %v158
    %v229 = vpop.permute.xlu0 %228
    %232 = vset.pattern.permute.xlu0 0
    %233 = vperm.xlu0 %232, %v159
    %v234 = vpop.permute.xlu0 %233
    %237 = vset.pattern.permute.xlu0 0
    %238 = vperm.xlu0 %237, %v160
    %v239 = vpop.permute.xlu0 %238
    %v241 = vadd.f32 %v129, %v164
    %v242 = vadd.f32 %v130, %v169
    %v243 = vadd.f32 %v131, %v174
    %v244 = vadd.f32 %v132, %v179
    %v245 = vadd.f32 %v133, %v184
    %v246 = vadd.f32 %v134, %v189
    %v247 = vadd.f32 %v135, %v194
    %v248 = vadd.f32 %v136, %v199
    %v249 = vadd.f32 %v137, %v204
    %v250 = vadd.f32 %v138, %v209
    %v251 = vadd.f32 %v139, %v214
    %v252 = vadd.f32 %v140, %v219
    %v253 = vadd.f32 %v141, %v224
    %v254 = vadd.f32 %v142, %v229
    %v255 = vadd.f32 %v143, %v234
    %v256 = vadd.f32 %v144, %v239
    %v257 = vmax.f32 %v241, 0.0
    %v258 = vmax.f32 %v242, 0.0
    %v259 = vmax.f32 %v243, 0.0
    %v260 = vmax.f32 %v244, 0.0
    %v261 = vmax.f32 %v245, 0.0
    %v262 = vmax.f32 %v246, 0.0
    %v263 = vmax.f32 %v247, 0.0
    %v264 = vmax.f32 %v248, 0.0
    %v265 = vmax.f32 %v249, 0.0
    %v266 = vmax.f32 %v250, 0.0
    %v267 = vmax.f32 %v251, 0.0
    %v268 = vmax.f32 %v252, 0.0
    %v269 = vmax.f32 %v253, 0.0
    %v270 = vmax.f32 %v254, 0.0
    %v271 = vmax.f32 %v255, 0.0
    %v272 = vmax.f32 %v256, 0.0
    %v273 = vld [vmem:[%s3] sm:$0xff]
    %v274 = vld [vmem:[%s3 + $0x8] sm:$0xff]
    %v275 = vld [vmem:[%s3 + $0x10] sm:$0xff]
    %v276 = vld [vmem:[%s3 + $0x18] sm:$0xff]
    %v277 = vld [vmem:[%s3 + $0x20] sm:$0xff]
    %v278 = vld [vmem:[%s3 + $0x28] sm:$0xff]
    %v279 = vld [vmem:[%s3 + $0x30] sm:$0xff]
    %v280 = vld [vmem:[%s3 + $0x38] sm:$0xff]
    %v281 = vld [vmem:[%s3 + $0x40] sm:$0xff]
    %v282 = vld [vmem:[%s3 + $0x48] sm:$0xff]
    %v283 = vld [vmem:[%s3 + $0x50] sm:$0xff]
    %v284 = vld [vmem:[%s3 + $0x58] sm:$0xff]
    %v285 = vld [vmem:[%s3 + $0x60] sm:$0xff]
    %v286 = vld [vmem:[%s3 + $0x68] sm:$0xff]
    %v287 = vld [vmem:[%s3 + $0x70] sm:$0xff]
    %v288 = vld [vmem:[%s3 + $0x78] sm:$0xff]
    %v289 = vld [vmem:[%s4] sm:$0xff]
    %v290 = vld [vmem:[%s4 + $0x8] sm:$0xff]
    %v291 = vld [vmem:[%s4 + $0x10] sm:$0xff]
    %v292 = vld [vmem:[%s4 + $0x18] sm:$0xff]
    %v293 = vld [vmem:[%s4 + $0x20] sm:$0xff]
    %v294 = vld [vmem:[%s4 + $0x28] sm:$0xff]
    %v295 = vld [vmem:[%s4 + $0x30] sm:$0xff]
    %v296 = vld [vmem:[%s4 + $0x38] sm:$0xff]
    %v297 = vld [vmem:[%s4 + $0x40] sm:$0xff]
    %v298 = vld [vmem:[%s4 + $0x48] sm:$0xff]
    %v299 = vld [vmem:[%s4 + $0x50] sm:$0xff]
    %v300 = vld [vmem:[%s4 + $0x58] sm:$0xff]
    %v301 = vld [vmem:[%s4 + $0x60] sm:$0xff]
    %v302 = vld [vmem:[%s4 + $0x68] sm:$0xff]
    %v303 = vld [vmem:[%s4 + $0x70] sm:$0xff]
    %v304 = vld [vmem:[%s4 + $0x78] sm:$0xff]
    %306 = vset.pattern.permute.xlu0 0
    %307 = vperm.xlu0 %306, %v289
    %v308 = vpop.permute.xlu0 %307
    %311 = vset.pattern.permute.xlu0 0
    %312 = vperm.xlu0 %311, %v290
    %v313 = vpop.permute.xlu0 %312
    %316 = vset.pattern.permute.xlu0 0
    %317 = vperm.xlu0 %316, %v291
    %v318 = vpop.permute.xlu0 %317
    %321 = vset.pattern.permute.xlu0 0
    %322 = vperm.xlu0 %321, %v292
    %v323 = vpop.permute.xlu0 %322
    %326 = vset.pattern.permute.xlu0 0
    %327 = vperm.xlu0 %326, %v293
    %v328 = vpop.permute.xlu0 %327
    %331 = vset.pattern.permute.xlu0 0
    %332 = vperm.xlu0 %331, %v294
    %v333 = vpop.permute.xlu0 %332
    %336 = vset.pattern.permute.xlu0 0
    %337 = vperm.xlu0 %336, %v295
    %v338 = vpop.permute.xlu0 %337
    %341 = vset.pattern.permute.xlu0 0
    %342 = vperm.xlu0 %341, %v296
    %v343 = vpop.permute.xlu0 %342
    %346 = vset.pattern.permute.xlu0 0
    %347 = vperm.xlu0 %346, %v297
    %v348 = vpop.permute.xlu0 %347
    %351 = vset.pattern.permute.xlu0 0
    %352 = vperm.xlu0 %351, %v298
    %v353 = vpop.permute.xlu0 %352
    %356 = vset.pattern.permute.xlu0 0
    %357 = vperm.xlu0 %356, %v299
    %v358 = vpop.permute.xlu0 %357
    %361 = vset.pattern.permute.xlu0 0
    %362 = vperm.xlu0 %361, %v300
    %v363 = vpop.permute.xlu0 %362
    %366 = vset.pattern.permute.xlu0 0
    %367 = vperm.xlu0 %366, %v301
    %v368 = vpop.permute.xlu0 %367
    %371 = vset.pattern.permute.xlu0 0
    %372 = vperm.xlu0 %371, %v302
    %v373 = vpop.permute.xlu0 %372
    %376 = vset.pattern.permute.xlu0 0
    %377 = vperm.xlu0 %376, %v303
    %v378 = vpop.permute.xlu0 %377
    %381 = vset.pattern.permute.xlu0 0
    %382 = vperm.xlu0 %381, %v304
    %v383 = vpop.permute.xlu0 %382
    %385 = vmatpush.msra.mxu0 %v272
    %386 = vmatpush.msra.mxu0 %v271
    %387 = vmatpush.msra.mxu0 %v270
    %388 = vmatpush.msra.mxu0 %v269
    %389 = vmatpush.msra.mxu0 %v268
    %390 = vmatpush.msra.mxu0 %v267
    %391 = vmatpush.msra.mxu0 %v266
    %392 = vmatpush.msra.mxu0 %v265
    %393 = vmatpush.msra.mxu0 %v264
    %394 = vmatpush.msra.mxu0 %v263
    %395 = vmatpush.msra.mxu0 %v262
    %396 = vmatpush.msra.mxu0 %v261
    %397 = vmatpush.msra.mxu0 %v260
    %398 = vmatpush.msra.mxu0 %v259
    %399 = vmatpush.msra.mxu0 %v258
    %400 = vmatpush.msra.mxu0 %v257
    %401 = vmatmul.f32.gmra.mxu0 %v273
    %v402 = vpop.f32.mrf.mxu0
    %v403 = vadd.f32 %v308, %v402
    %404 = vmatmul.f32.gmra.mxu0 %v274
    %v405 = vpop.f32.mrf.mxu0
    %v406 = vadd.f32 %v313, %v405
    %407 = vmatmul.f32.gmra.mxu0 %v275
    %v408 = vpop.f32.mrf.mxu0
    %v409 = vadd.f32 %v318, %v408
    %410 = vmatmul.f32.gmra.mxu0 %v276
    %v411 = vpop.f32.mrf.mxu0
    %v412 = vadd.f32 %v323, %v411
    %413 = vmatmul.f32.gmra.mxu0 %v277
    %v414 = vpop.f32.mrf.mxu0
    %v415 = vadd.f32 %v328, %v414
    %416 = vmatmul.f32.gmra.mxu0 %v278
    %v417 = vpop.f32.mrf.mxu0
    %v418 = vadd.f32 %v333, %v417
    %419 = vmatmul.f32.gmra.mxu0 %v279
    %v420 = vpop.f32.mrf.mxu0
    %v421 = vadd.f32 %v338, %v420
    %422 = vmatmul.f32.gmra.mxu0 %v280
    %v423 = vpop.f32.mrf.mxu0
    %v424 = vadd.f32 %v343, %v423
    %425 = vmatmul.f32.gmra.mxu0 %v281
    %v426 = vpop.f32.mrf.mxu0
    %v427 = vadd.f32 %v348, %v426
    %428 = vmatmul.f32.gmra.mxu0 %v282
    %v429 = vpop.f32.mrf.mxu0
    %v430 = vadd.f32 %v353, %v429
    %431 = vmatmul.f32.gmra.mxu0 %v283
    %v432 = vpop.f32.mrf.mxu0
    %v433 = vadd.f32 %v358, %v432
    %434 = vmatmul.f32.gmra.mxu0 %v284
    %v435 = vpop.f32.mrf.mxu0
    %v436 = vadd.f32 %v363, %v435
    %437 = vmatmul.f32.gmra.mxu0 %v285
    %v438 = vpop.f32.mrf.mxu0
    %v439 = vadd.f32 %v368, %v438
    %440 = vmatmul.f32.gmra.mxu0 %v286
    %v441 = vpop.f32.mrf.mxu0
    %v442 = vadd.f32 %v373, %v441
    %443 = vmatmul.f32.gmra.mxu0 %v287
    %v444 = vpop.f32.mrf.mxu0
    %v445 = vadd.f32 %v378, %v444
    %446 = vmatmul.f32.gmra.mxu0 %v288
    %v447 = vpop.f32.mrf.mxu0
    %v448 = vadd.f32 %v383, %v447
    %449 = vdwg.mxu0
    %v450 = vmax.f32 %v403, 0.0
    %v451 = vmax.f32 %v406, 0.0
    %v452 = vmax.f32 %v409, 0.0
    %v453 = vmax.f32 %v412, 0.0
    %v454 = vmax.f32 %v415, 0.0
    %v455 = vmax.f32 %v418, 0.0
    %v456 = vmax.f32 %v421, 0.0
    %v457 = vmax.f32 %v424, 0.0
    %v458 = vmax.f32 %v427, 0.0
    %v459 = vmax.f32 %v430, 0.0
    %v460 = vmax.f32 %v433, 0.0
    %v461 = vmax.f32 %v436, 0.0
    %v462 = vmax.f32 %v439, 0.0
    %v463 = vmax.f32 %v442, 0.0
    %v464 = vmax.f32 %v445, 0.0
    %v465 = vmax.f32 %v448, 0.0
    %v466 = vld [vmem:[%s5] sm:$0x1]
    %v467 = vld [vmem:[#allocation2] sm:$0x1]
    %469 = vset.pattern.permute.xlu0 0
    %470 = vperm.xlu0 %469, %v467
    %v471 = vpop.permute.xlu0 %470
    %v473 = vperm.slane %v471, 0
    %474 = vmatpush.msra.mxu0 %v465
    %475 = vmatpush.msra.mxu0 %v464
    %476 = vmatpush.msra.mxu0 %v463
    %477 = vmatpush.msra.mxu0 %v462
    %478 = vmatpush.msra.mxu0 %v461
    %479 = vmatpush.msra.mxu0 %v460
    %480 = vmatpush.msra.mxu0 %v459
    %481 = vmatpush.msra.mxu0 %v458
    %482 = vmatpush.msra.mxu0 %v457
    %483 = vmatpush.msra.mxu0 %v456
    %484 = vmatpush.msra.mxu0 %v455
    %485 = vmatpush.msra.mxu0 %v454
    %486 = vmatpush.msra.mxu0 %v453
    %487 = vmatpush.msra.mxu0 %v452
    %488 = vmatpush.msra.mxu0 %v451
    %489 = vmatpush.msra.mxu0 %v450
    %490 = vmatmul.f32.gmra.mxu0 %v466
    %v491 = vpop.f32.mrf.mxu0
    %v492 = vadd.f32 %v473, %v491
    %493 = vdwg.mxu0
    %494 = vst [vmem:[#allocation3] sm:$0x1] %v492
    // Predicated region
    $region30: #{tpu_custom_call.1} parent=1 // pred_check
      _
    $region31: #{tpu_custom_call.1} parent=1 // pred_check_branch
      %496 = sbr.rel (0) target = $region33
    $region32: #{tpu_custom_call.1} parent=1 // pred_region
      %498 = vsyncadd [#allocation4], 0
      %s500 = sshll.u32 [#allocation3], 4
      %s501 = int_to_ptr.vmem [resolvable:$true] %s500
      %s502 = sshll.u32 %s7, 4
      %s503 = int_to_ptr.hbm [resolvable:$true] %s502
      %505 = dma.vmem_to_hbm [thread:$0]  %s501, 16, %s503, [#allocation4]
    $region33: #{tpu_custom_call.1} parent=1 // pred_fallthru
      _
    // Predicated region
    $region34: #{tpu_custom_call.1} parent=1 // pred_check
      _
    $region35: #{tpu_custom_call.1} parent=1 // pred_check_branch
      %507 = sbr.rel (0) target = $region37
    $region36: #{tpu_custom_call.1} parent=1 // pred_region
      %509 = dma.done [#allocation4], 16
    $region37: #{tpu_custom_call.1} parent=1 // pred_fallthru
      _
    %510 = vsyncpa [#allocation4], 1

</llo_original>
